<compile_context>
chip_gen: v6e
topology: v6e:2x2x1
jax: 0.10.0
libtpu: 0.0.40
codegen_flags: <defaults>
</compile_context>

<pallas_src>
import functools

import jax
import jax.numpy as jnp
from jax.experimental import pallas as pl
from jax.experimental.pallas import tpu as pltpu

LANES = 128              # lane width of a vreg
DEFAULT_ROW_TILE = 2048  # rows per grid step (2048*128*4B = 1 MiB f32 tile)


def _ftl_partial_sums_kernel(t_ref, x_ref, out_ref,
                             acc_pt_ref, acc_p_ref, acc_t_ref,
                             *, n_valid, row_tile):
    """Accumulate per-core partial sums of p*t, p, t over streamed tiles.

    t_ref, x_ref : (row_tile, LANES) tiles of targets / raw logits
    out_ref      : (1, 3, 8, LANES) f32 block -> per-core [sum(p*t), sum(p), sum(t)]
                   (each scalar broadcast over the (8, LANES) tile)
    acc_*_ref    : (row_tile, LANES) f32 VMEM vector accumulators
    """
    c = pl.program_id(0)          # core-split axis ("parallel")
    s = pl.program_id(1)          # streaming axis ("arbitrary")
    steps = pl.num_programs(1)

    @pl.when(s == 0)
    def _init():
        acc_pt_ref[...] = jnp.zeros_like(acc_pt_ref)
        acc_p_ref[...] = jnp.zeros_like(acc_p_ref)
        acc_t_ref[...] = jnp.zeros_like(acc_t_ref)

    # Logical (unclamped) tile id -> global flat element index, used to mask
    # out padding, the partial tail tile, and any duplicated clamped tile.
    tile_id = c * steps + s
    base = tile_id * (row_tile * LANES)
    row = jax.lax.broadcasted_iota(jnp.int32, (row_tile, LANES), 0)
    lane = jax.lax.broadcasted_iota(jnp.int32, (row_tile, LANES), 1)
    valid = (base + row * LANES + lane) < n_valid

    # Cast to f32 in-kernel (bf16 is storage-only on v5e); sigmoid runs on EUP.
    p = jax.nn.sigmoid(x_ref[...].astype(jnp.float32))
    t = t_ref[...].astype(jnp.float32)
    p = jnp.where(valid, p, 0.0)
    t = jnp.where(valid, t, 0.0)

    # Vector accumulation only (VPU); no per-step cross-lane reductions.
    acc_pt_ref[...] += p * t
    acc_p_ref[...] += p
    acc_t_ref[...] += t

    @pl.when(s == steps - 1)
    def _finalize():
        out_ref[0, 0] = jnp.full((8, LANES), jnp.sum(acc_pt_ref[...]), jnp.float32)
        out_ref[0, 1] = jnp.full((8, LANES), jnp.sum(acc_p_ref[...]), jnp.float32)
        out_ref[0, 2] = jnp.full((8, LANES), jnp.sum(acc_t_ref[...]), jnp.float32)


@functools.partial(jax.jit, static_argnames=("alpha", "beta", "gamma", "smooth"))
def focal_tversky_loss(targets, inputs, alpha=0.7, beta=0.3, gamma=2.0,
                       smooth=1e-6):
    t = targets.reshape(-1)
    x = inputs.reshape(-1)
    if not jnp.issubdtype(t.dtype, jnp.floating):
        t = t.astype(jnp.float32)
    if not jnp.issubdtype(x.dtype, jnp.floating):
        x = x.astype(jnp.float32)

    n = t.shape[0]
    # Pad only to the next multiple of 128 (with a 16-row minimum) so the flat
    # data can be viewed as (rows, 128).  Padded elements are masked in-kernel,
    # so the pad value is irrelevant; no pad/copy at all for the common case
    # where the flat size is already a multiple of 128.
    padded = max(pl.cdiv(n, LANES) * LANES, 16 * LANES)
    if padded != n:
        t = jnp.concatenate([t, jnp.zeros((padded - n,), t.dtype)])
        x = jnp.concatenate([x, jnp.zeros((padded - n,), x.dtype)])
    rows = padded // LANES
    t2 = t.reshape(rows, LANES)
    x2 = x.reshape(rows, LANES)

    row_tile = min(DEFAULT_ROW_TILE, (rows // 16) * 16)   # multiple of 16, <= rows
    total_tiles = pl.cdiv(rows, row_tile)
    steps = pl.cdiv(total_tiles, 2)                       # tiles per core-half

    def in_index_map(c, s):
        # Clamp so the (possibly empty) tail of core 1 re-reads a valid tile;
        # the in-kernel mask zeroes its contribution.
        return (jnp.minimum(c * steps + s, total_tiles - 1), 0)

    kernel = functools.partial(_ftl_partial_sums_kernel,
                               n_valid=n, row_tile=row_tile)

    sums = pl.pallas_call(
        kernel,
        out_shape=jax.ShapeDtypeStruct((2, 3, 8, LANES), jnp.float32),
        grid_spec=pltpu.PrefetchScalarGridSpec(
            num_scalar_prefetch=0,
            grid=(2, steps),
            in_specs=[
                pl.BlockSpec((row_tile, LANES), in_index_map),
                pl.BlockSpec((row_tile, LANES), in_index_map),
            ],
            out_specs=pl.BlockSpec((1, 3, 8, LANES), lambda c, s: (c, 0, 0, 0)),
            scratch_shapes=[pltpu.VMEM((row_tile, LANES), jnp.float32)
                            for _ in range(3)],
        ),
        compiler_params=pltpu.CompilerParams(
            dimension_semantics=("parallel", "arbitrary")),
    )(t2, x2)

    partial = sums[:, :, 0, 0]        # (2, 3): per-core [TP, sum_p, sum_t]
    tp = partial[:, 0].sum()
    sum_p = partial[:, 1].sum()
    sum_t = partial[:, 2].sum()
    fp = sum_p - tp                   # sum((1 - t) * p)
    fn = sum_t - tp                   # sum(t * (1 - p))
    tversky = (tp + smooth) / (tp + alpha * fp + beta * fn + smooth)
    return jnp.power(1.0 - tversky, gamma)


def _reference(targets, inputs, alpha=0.7, beta=0.3, gamma=2.0, smooth=1e-6):
    p = jax.nn.sigmoid(inputs.reshape(-1).astype(jnp.float32))
    t = targets.reshape(-1).astype(jnp.float32)
    tp = jnp.sum(p * t)
    fp = jnp.sum((1.0 - t) * p)
    fn = jnp.sum(t * (1.0 - p))
    tversky = (tp + smooth) / (tp + alpha * fp + beta * fn + smooth)
    return jnp.power(1.0 - tversky, gamma)


if __name__ == "__main__":
    key = jax.random.PRNGKey(0)
    k_t, k_x = jax.random.split(key)

    # targets: binary ground-truth mask; inputs: raw logits.  NCHW shapes.
    shape = (2, 4, 16, 16)
    targets = (jax.random.uniform(k_t, shape) > 0.5).astype(jnp.float32)
    inputs = jax.random.normal(k_x, shape, dtype=jnp.float32)

    loss = focal_tversky_loss(targets, inputs)
    loss = jax.block_until_ready(loss)

    ref = _reference(targets, inputs)
    assert jnp.allclose(loss, ref, rtol=1e-5, atol=1e-5), (loss, ref)

    print("KERNEL_OK")
</pallas_src>

<mosaic_0001>
module attributes {stable_mosaic.version = 11 : i64} {
  func.func @_ftl_partial_sums_kernel(%arg0: i32, %arg1: i32, %arg2: memref<16x128xf32, #tpu.memory_space<vmem>>, %arg3: memref<16x128xf32, #tpu.memory_space<vmem>>, %arg4: memref<1x3x8x128xf32, #tpu.memory_space<vmem>>, %arg5: memref<16x128xf32, #tpu.memory_space<vmem>>, %arg6: memref<16x128xf32, #tpu.memory_space<vmem>>, %arg7: memref<16x128xf32, #tpu.memory_space<vmem>>) attributes {dimension_semantics = [#tpu.dimension_semantics<parallel>, #tpu.dimension_semantics<arbitrary>], iteration_bounds = array<i64: 2, 1>, scalar_prefetch = 0 : i64, scratch_operands = 3 : i64, tpu.core_type = #tpu.core_type<tc>, window_params = [{transform_indices = @transform_0, window_bounds = array<i64: 16, 128>}, {transform_indices = @transform_1, window_bounds = array<i64: 16, 128>}, {transform_indices = @transform_2, window_bounds = array<i64: 1, 3, 8, 128>}]} {
    %c0_i32 = arith.constant 0 : i32
    %0 = arith.cmpi eq, %arg1, %c0_i32 : i32
    %1 = arith.extui %0 : i1 to i32
    %c0_i32_0 = arith.constant 0 : i32
    %2 = arith.cmpi ne, %1, %c0_i32_0 : i32
    scf.if %2 {
      %cst_21 = arith.constant 0.000000e+00 : f32
      %39 = vector.broadcast %cst_21 : f32 to vector<16x128xf32>
      %c0_22 = arith.constant 0 : index
      %c0_23 = arith.constant 0 : index
      %40 = vector.load %arg5[%c0_22, %c0_23] : memref<16x128xf32, #tpu.memory_space<vmem>>, vector<16x128xf32>
      tpu.vector_store %arg5[%c0_22, %c0_23], %39 {strides = array<i32>} : memref<16x128xf32, #tpu.memory_space<vmem>>, vector<16x128xf32>,
      %cst_24 = arith.constant 0.000000e+00 : f32
      %41 = vector.broadcast %cst_24 : f32 to vector<16x128xf32>
      %c0_25 = arith.constant 0 : index
      %c0_26 = arith.constant 0 : index
      %42 = vector.load %arg6[%c0_25, %c0_26] : memref<16x128xf32, #tpu.memory_space<vmem>>, vector<16x128xf32>
      tpu.vector_store %arg6[%c0_25, %c0_26], %41 {strides = array<i32>} : memref<16x128xf32, #tpu.memory_space<vmem>>, vector<16x128xf32>,
      %cst_27 = arith.constant 0.000000e+00 : f32
      %43 = vector.broadcast %cst_27 : f32 to vector<16x128xf32>
      %c0_28 = arith.constant 0 : index
      %c0_29 = arith.constant 0 : index
      %44 = vector.load %arg7[%c0_28, %c0_29] : memref<16x128xf32, #tpu.memory_space<vmem>>, vector<16x128xf32>
      tpu.vector_store %arg7[%c0_28, %c0_29], %43 {strides = array<i32>} : memref<16x128xf32, #tpu.memory_space<vmem>>, vector<16x128xf32>,
    } else {
    }
    %c1_i32 = arith.constant 1 : i32
    %3 = arith.muli %arg0, %c1_i32 : i32
    %4 = arith.addi %3, %arg1 : i32
    %c2048_i32 = arith.constant 2048 : i32
    %5 = arith.muli %4, %c2048_i32 : i32
    %6 = tpu.iota {dimensions = array<i32: 0>} : vector<16x128xi32>
    %7 = tpu.iota {dimensions = array<i32: 1>} : vector<16x128xi32>
    %c128_i32 = arith.constant 128 : i32
    %8 = vector.broadcast %c128_i32 : i32 to vector<16x128xi32>
    %9 = arith.muli %6, %8 : vector<16x128xi32>
    %10 = vector.broadcast %5 : i32 to vector<16x128xi32>
    %11 = arith.addi %10, %9 : vector<16x128xi32>
    %12 = arith.addi %11, %7 : vector<16x128xi32>
    %c2048_i32_1 = arith.constant 2048 : i32
    %13 = vector.broadcast %c2048_i32_1 : i32 to vector<16x128xi32>
    %14 = arith.cmpi slt, %12, %13 : vector<16x128xi32>
    %c0 = arith.constant 0 : index
    %c0_2 = arith.constant 0 : index
    %15 = vector.load %arg3[%c0, %c0_2] : memref<16x128xf32, #tpu.memory_space<vmem>>, vector<16x128xf32>
    %16 = arith.negf %15 : vector<16x128xf32>
    %17 = math.exp %16 : vector<16x128xf32>
    %cst = arith.constant 1.000000e+00 : f32
    %18 = vector.broadcast %cst : f32 to vector<16x128xf32>
    %19 = arith.addf %18, %17 : vector<16x128xf32>
    %20 = arith.divf %18, %19 : vector<16x128xf32>
    %c0_3 = arith.constant 0 : index
    %c0_4 = arith.constant 0 : index
    %21 = vector.load %arg2[%c0_3, %c0_4] : memref<16x128xf32, #tpu.memory_space<vmem>>, vector<16x128xf32>
    %cst_5 = arith.constant 0.000000e+00 : f32
    %22 = vector.broadcast %cst_5 : f32 to vector<16x128xf32>
    %23 = arith.select %14, %20, %22 : vector<16x128xi1>, vector<16x128xf32>
    %cst_6 = arith.constant 0.000000e+00 : f32
    %24 = vector.broadcast %cst_6 : f32 to vector<16x128xf32>
    %25 = arith.select %14, %21, %24 : vector<16x128xi1>, vector<16x128xf32>
    %c0_7 = arith.constant 0 : index
    %c0_8 = arith.constant 0 : index
    %26 = vector.load %arg5[%c0_7, %c0_8] : memref<16x128xf32, #tpu.memory_space<vmem>>, vector<16x128xf32>
    %27 = arith.mulf %23, %25 : vector<16x128xf32>
    %28 = arith.addf %26, %27 : vector<16x128xf32>
    %c0_9 = arith.constant 0 : index
    %c0_10 = arith.constant 0 : index
    %29 = vector.load %arg5[%c0_9, %c0_10] : memref<16x128xf32, #tpu.memory_space<vmem>>, vector<16x128xf32>
    tpu.vector_store %arg5[%c0_9, %c0_10], %28 {strides = array<i32>} : memref<16x128xf32, #tpu.memory_space<vmem>>, vector<16x128xf32>,
    %c0_11 = arith.constant 0 : index
    %c0_12 = arith.constant 0 : index
    %30 = vector.load %arg6[%c0_11, %c0_12] : memref<16x128xf32, #tpu.memory_space<vmem>>, vector<16x128xf32>
    %31 = arith.addf %30, %23 : vector<16x128xf32>
    %c0_13 = arith.constant 0 : index
    %c0_14 = arith.constant 0 : index
    %32 = vector.load %arg6[%c0_13, %c0_14] : memref<16x128xf32, #tpu.memory_space<vmem>>, vector<16x128xf32>
    tpu.vector_store %arg6[%c0_13, %c0_14], %31 {strides = array<i32>} : memref<16x128xf32, #tpu.memory_space<vmem>>, vector<16x128xf32>,
    %c0_15 = arith.constant 0 : index
    %c0_16 = arith.constant 0 : index
    %33 = vector.load %arg7[%c0_15, %c0_16] : memref<16x128xf32, #tpu.memory_space<vmem>>, vector<16x128xf32>
    %34 = arith.addf %33, %25 : vector<16x128xf32>
    %c0_17 = arith.constant 0 : index
    %c0_18 = arith.constant 0 : index
    %35 = vector.load %arg7[%c0_17, %c0_18] : memref<16x128xf32, #tpu.memory_space<vmem>>, vector<16x128xf32>
    tpu.vector_store %arg7[%c0_17, %c0_18], %34 {strides = array<i32>} : memref<16x128xf32, #tpu.memory_space<vmem>>, vector<16x128xf32>,
    %c0_i32_19 = arith.constant 0 : i32
    %36 = arith.cmpi eq, %arg1, %c0_i32_19 : i32
    %37 = arith.extui %36 : i1 to i32
    %c0_i32_20 = arith.constant 0 : i32
    %38 = arith.cmpi ne, %37, %c0_i32_20 : i32
    scf.if %38 {
      %c0_21 = arith.constant 0 : index
      %c0_22 = arith.constant 0 : index
      %39 = vector.load %arg5[%c0_21, %c0_22] : memref<16x128xf32, #tpu.memory_space<vmem>>, vector<16x128xf32>
      %40 = vector.shape_cast %39 : vector<16x128xf32> to vector<1x16x128xf32>
      %cst_23 = arith.constant dense<0.000000e+00> : vector<1xf32>
      %41 = vector.multi_reduction <add>, %40, %cst_23 [1, 2] : vector<1x16x128xf32> to vector<1xf32>
      %42 = vector.shape_cast %41 : vector<1xf32> to vector<1x1x1xf32>
      %43 = vector.extract %42[0, 0, 0] : f32 from vector<1x1x1xf32>
      %44 = vector.broadcast %43 : f32 to vector<8x128xf32>
      %c0_24 = arith.constant 0 : index
      %c0_25 = arith.constant 0 : index
      %c0_26 = arith.constant 0 : index
      %c0_27 = arith.constant 0 : index
      %45 = vector.load %arg4[%c0_24, %c0_25, %c0_26, %c0_27] : memref<1x3x8x128xf32, #tpu.memory_space<vmem>>, vector<1x1x8x128xf32>
      %46 = vector.shape_cast %45 : vector<1x1x8x128xf32> to vector<8x128xf32>
      %47 = vector.shape_cast %44 : vector<8x128xf32> to vector<1x1x8x128xf32>
      tpu.vector_store %arg4[%c0_24, %c0_25, %c0_26, %c0_27], %47 {strides = array<i32>} : memref<1x3x8x128xf32, #tpu.memory_space<vmem>>, vector<1x1x8x128xf32>,
      %c0_28 = arith.constant 0 : index
      %c0_29 = arith.constant 0 : index
      %48 = vector.load %arg6[%c0_28, %c0_29] : memref<16x128xf32, #tpu.memory_space<vmem>>, vector<16x128xf32>
      %49 = vector.shape_cast %48 : vector<16x128xf32> to vector<1x16x128xf32>
      %cst_30 = arith.constant dense<0.000000e+00> : vector<1xf32>
      %50 = vector.multi_reduction <add>, %49, %cst_30 [1, 2] : vector<1x16x128xf32> to vector<1xf32>
      %51 = vector.shape_cast %50 : vector<1xf32> to vector<1x1x1xf32>
      %52 = vector.extract %51[0, 0, 0] : f32 from vector<1x1x1xf32>
      %53 = vector.broadcast %52 : f32 to vector<8x128xf32>
      %c0_31 = arith.constant 0 : index
      %c1 = arith.constant 1 : index
      %c0_32 = arith.constant 0 : index
      %c0_33 = arith.constant 0 : index
      %54 = vector.load %arg4[%c0_31, %c1, %c0_32, %c0_33] : memref<1x3x8x128xf32, #tpu.memory_space<vmem>>, vector<1x1x8x128xf32>
      %55 = vector.shape_cast %54 : vector<1x1x8x128xf32> to vector<8x128xf32>
      %56 = vector.shape_cast %53 : vector<8x128xf32> to vector<1x1x8x128xf32>
      tpu.vector_store %arg4[%c0_31, %c1, %c0_32, %c0_33], %56 {strides = array<i32>} : memref<1x3x8x128xf32, #tpu.memory_space<vmem>>, vector<1x1x8x128xf32>,
      %c0_34 = arith.constant 0 : index
      %c0_35 = arith.constant 0 : index
      %57 = vector.load %arg7[%c0_34, %c0_35] : memref<16x128xf32, #tpu.memory_space<vmem>>, vector<16x128xf32>
      %58 = vector.shape_cast %57 : vector<16x128xf32> to vector<1x16x128xf32>
      %cst_36 = arith.constant dense<0.000000e+00> : vector<1xf32>
      %59 = vector.multi_reduction <add>, %58, %cst_36 [1, 2] : vector<1x16x128xf32> to vector<1xf32>
      %60 = vector.shape_cast %59 : vector<1xf32> to vector<1x1x1xf32>
      %61 = vector.extract %60[0, 0, 0] : f32 from vector<1x1x1xf32>
      %62 = vector.broadcast %61 : f32 to vector<8x128xf32>
      %c0_37 = arith.constant 0 : index
      %c2 = arith.constant 2 : index
      %c0_38 = arith.constant 0 : index
      %c0_39 = arith.constant 0 : index
      %63 = vector.load %arg4[%c0_37, %c2, %c0_38, %c0_39] : memref<1x3x8x128xf32, #tpu.memory_space<vmem>>, vector<1x1x8x128xf32>
      %64 = vector.shape_cast %63 : vector<1x1x8x128xf32> to vector<8x128xf32>
      %65 = vector.shape_cast %62 : vector<8x128xf32> to vector<1x1x8x128xf32>
      tpu.vector_store %arg4[%c0_37, %c2, %c0_38, %c0_39], %65 {strides = array<i32>} : memref<1x3x8x128xf32, #tpu.memory_space<vmem>>, vector<1x1x8x128xf32>,
    } else {
    }
    return
  }
  func.func @transform_0(%arg0: i32, %arg1: i32) -> (i32, i32) {
    %c1_i32 = arith.constant 1 : i32
    %0 = arith.muli %arg0, %c1_i32 : i32
    %1 = arith.addi %0, %arg1 : i32
    %c0_i32 = arith.constant 0 : i32
    %2 = arith.minsi %1, %c0_i32 : i32
    %c0_i32_0 = arith.constant 0 : i32
    %c0_i32_1 = arith.constant 0 : i32
    return %2, %c0_i32_0 : i32, i32
  }
  func.func @transform_1(%arg0: i32, %arg1: i32) -> (i32, i32) {
    %c1_i32 = arith.constant 1 : i32
    %0 = arith.muli %arg0, %c1_i32 : i32
    %1 = arith.addi %0, %arg1 : i32
    %c0_i32 = arith.constant 0 : i32
    %2 = arith.minsi %1, %c0_i32 : i32
    %c0_i32_0 = arith.constant 0 : i32
    %c0_i32_1 = arith.constant 0 : i32
    return %2, %c0_i32_0 : i32, i32
  }
  func.func @transform_2(%arg0: i32, %arg1: i32) -> (i32, i32, i32, i32) {
    %c0_i32 = arith.constant 0 : i32
    %c0_i32_0 = arith.constant 0 : i32
    %c0_i32_1 = arith.constant 0 : i32
    %c0_i32_2 = arith.constant 0 : i32
    return %arg0, %c0_i32, %c0_i32_0, %c0_i32_1 : i32, i32, i32, i32
  }
}

</mosaic_0001>

<llo_original>
// kernel: focal_tversky_loss.1
$region0: #{focal_tversky_loss.1}
  #allocation0 [shape = 'u32[]', space=smem, size = 0x4, offset = 0x4, fixed_abs, tag = 'smem constant byte address 0x4 - core index']
  #allocation1 [shape = 'u32[144,128]{1,0:T(1,128)}', space=vmem, size = 0x12000, scoped, tag = 'internal scratch']
  #allocation2 [shape = 'f32[16,128]{1,0:T(8,128)}', space=vmem, size = 0x2000, scoped, tag = 'scratch operand']
  #allocation3 [shape = 'f32[16,128]{1,0:T(8,128)}', space=vmem, size = 0x2000, scoped, tag = 'scratch operand']
  #allocation4 [shape = 'f32[16,128]{1,0:T(8,128)}', space=vmem, size = 0x2000, scoped, tag = 'scratch operand']
  %s0 = inlined_call_operand.vmem [shape: f32[16,128], index: 0, kind: input, shape index: {}]
  %s1 = inlined_call_operand.vmem [shape: f32[16,128], index: 1, kind: input, shape index: {}]
  %s2 = inlined_call_operand.vmem [shape: f32[2,3,8,128], index: 2, kind: output, shape index: {}]
  %s3 = sld [smem:[#allocation0]]
  $region49: #{focal_tversky_loss.1} parent=0
    _
  %s5 = ssub.s32 1, %s3
  %s6 = scalar_select 0, %s5, %s3
  loop: start=0, step=1, limit=4
  $region2: #{focal_tversky_loss.1} parent=0 // loop_pre_header
    _
  $region3: #{focal_tversky_loss.1} parent=0 // loop_header
    %s8 = sphi 0, %s12
    %p9 = scmp.ge.s32.totalorder %s8, 4
    %s15 = sphi 0, %s27
    %s16 = sphi 0, %s23
    %s17 = sphi 0, %s15
    %s18 = sphi 0, %s16
    %s19 = sphi 0, %s17
    %s20 = sphi 0, %s18
    %s36 = sphi 0, %s38
    %s39 = sphi 0, %s36
    %s40 = sphi 0, %s39
    %s56 = sphi 0, %s40
    %s68 = sphi 0, %s70
    %s71 = sphi 0, %s68
    %s72 = sphi 0, %s71
    %s88 = sphi 0, %s72
    %s94 = sphi 0, %s96
    %s97 = sphi 0, %s94
    %s98 = sphi 0, %s97
    %s114 = sphi 0, %s98
  $region4: #{focal_tversky_loss.1} parent=0 // loop_header_branch
    %11 = sbr.rel (%p9) target = $region8
  $region5: #{focal_tversky_loss.1} parent=0 // loop_body
    %s13 = ssub.s32 %s8, 1
    %s14 = ssub.s32 %s8, 2
    %s21 = sadd.s32 1, %s16
    %p22 = scmp.ge.s32.totalorder %s21, 1
    %s23 = scalar_select %p22, 0, %s21
    %s24 = sadd.s32 1, %s15
    %s25 = scalar_select %p22, %s24, %s15
    %p26 = scmp.ge.s32.totalorder %s25, 2
    %s27 = scalar_select %p26, 0, %s25
    %s28 = sadd.s32 %s15, %s16
    %p29 = scmp.lt.s32.totalorder %s28, 0
    %s30 = scalar_select %p29, %s28, 0
    %s31 = sadd.s32 %s27, %s23
    %p32 = scmp.lt.s32.totalorder %s31, 0
    %s33 = scalar_select %p32, %s31, 0
    %s34 = ssub.s32 %s30, %s33
    %p35 = scmp.eq.s32.totalorder %s34, 0
    %s37 = sadd.s32 %s36, 1
    %s38 = scalar_select %p35, %s36, %s37
    %p41 = pneg %p35
    %p42 = scmp.eq.s32.totalorder %s8, 1
    %p43 = por %p41, %p42
    %p44 = scmp.ne.s32.totalorder %s36, %s39
    %p45 = scmp.eq.s32.totalorder %s8, 0
    %p46 = por %p44, %p45
    %p47 = scmp.ne.s32.totalorder %s36, %s39
    %p48 = scmp.eq.s32.totalorder %s13, 1
    %p49 = por %p47, %p48
    %p50 = scmp.ne.s32.totalorder %s39, %s40
    %p51 = scmp.eq.s32.totalorder %s13, 0
    %p52 = por %p50, %p51
    %p53 = scmp.ne.s32.totalorder %s39, %s40
    %p54 = scmp.eq.s32.totalorder %s14, 1
    %p55 = por %p53, %p54
    %p57 = scmp.ne.s32.totalorder %s40, %s56
    %p58 = scmp.eq.s32.totalorder %s14, 0
    %p59 = por %p57, %p58
    %s60 = sadd.s32 %s15, %s16
    %p61 = scmp.lt.s32.totalorder %s60, 0
    %s62 = scalar_select %p61, %s60, 0
    %s63 = sadd.s32 %s27, %s23
    %p64 = scmp.lt.s32.totalorder %s63, 0
    %s65 = scalar_select %p64, %s63, 0
    %s66 = ssub.s32 %s62, %s65
    %p67 = scmp.eq.s32.totalorder %s66, 0
    %s69 = sadd.s32 %s68, 1
    %s70 = scalar_select %p67, %s68, %s69
    %p73 = pneg %p67
    %p74 = scmp.eq.s32.totalorder %s8, 1
    %p75 = por %p73, %p74
    %p76 = scmp.ne.s32.totalorder %s68, %s71
    %p77 = scmp.eq.s32.totalorder %s8, 0
    %p78 = por %p76, %p77
    %p79 = scmp.ne.s32.totalorder %s68, %s71
    %p80 = scmp.eq.s32.totalorder %s13, 1
    %p81 = por %p79, %p80
    %p82 = scmp.ne.s32.totalorder %s71, %s72
    %p83 = scmp.eq.s32.totalorder %s13, 0
    %p84 = por %p82, %p83
    %p85 = scmp.ne.s32.totalorder %s71, %s72
    %p86 = scmp.eq.s32.totalorder %s14, 1
    %p87 = por %p85, %p86
    %p89 = scmp.ne.s32.totalorder %s72, %s88
    %p90 = scmp.eq.s32.totalorder %s14, 0
    %p91 = por %p89, %p90
    %s92 = ssub.s32 %s15, %s27
    %p93 = scmp.eq.s32.totalorder %s92, 0
    %s95 = sadd.s32 %s94, 1
    %s96 = scalar_select %p93, %s94, %s95
    %p99 = pneg %p93
    %p100 = scmp.eq.s32.totalorder %s8, 1
    %p101 = por %p99, %p100
    %p102 = scmp.ne.s32.totalorder %s94, %s97
    %p103 = scmp.eq.s32.totalorder %s8, 0
    %p104 = por %p102, %p103
    %p105 = scmp.ne.s32.totalorder %s94, %s97
    %p106 = scmp.eq.s32.totalorder %s13, 1
    %p107 = por %p105, %p106
    %p108 = scmp.ne.s32.totalorder %s97, %s98
    %p109 = scmp.eq.s32.totalorder %s13, 0
    %p110 = por %p108, %p109
    %p111 = scmp.ne.s32.totalorder %s97, %s98
    %p112 = scmp.eq.s32.totalorder %s14, 1
    %p113 = por %p111, %p112
    %p115 = scmp.ne.s32.totalorder %s98, %s114
    %p116 = scmp.eq.s32.totalorder %s14, 0
    %p117 = por %p115, %p116
    %p118 = scmp.le.s32.totalorder 1, %s8
    %p119 = scmp.lt.s32.totalorder %s8, 3
    %p120 = pnand %p118, %p119
    %p121 = pneg %p120
    // Predicated region
    $region9: #{focal_tversky_loss.1} parent=5 // pred_check
      _
    $region10: #{focal_tversky_loss.1} parent=5 // pred_check_branch
      %123 = sbr.rel (%p120) target = $region12
    $region11: #{focal_tversky_loss.1} parent=5 // pred_region
      %s124 = ssub.s32 %s8, 1
    $region12: #{focal_tversky_loss.1} parent=5 // pred_fallthru
      _
    %p125 = scmp.lt.s32.totalorder %s8, 2
    // Predicated region
    $region13: #{focal_tversky_loss.1} parent=5 // pred_check
      %p126 = pneg %p125
    $region14: #{focal_tversky_loss.1} parent=5 // pred_check_branch
      %128 = sbr.rel (%p126) target = $region16
    $region15: #{focal_tversky_loss.1} parent=5 // pred_region
      // Predicated region
      $region17: #{focal_tversky_loss.1} parent=15 // pred_check
        %p129 = pneg %p46
      $region18: #{focal_tversky_loss.1} parent=15 // pred_check_branch
        %131 = sbr.rel (%p129) target = $region20
      $region19: #{focal_tversky_loss.1} parent=15 // pred_region
        %s132 = sadd.s32 %s15, %s16
        %p133 = scmp.lt.s32.totalorder %s132, 0
        %s134 = scalar_select %p133, %s132, 0
        %s135 = smul.u32 2, %s134
        %p136 = scmp.lt.s32.totalorder %s135, 1
        %s137 = scalar_select %p136, %s135, 1
        %s138 = smul.addr %s137, 8
        %s139 = scalar_lea.vmem %s0, %s138
        %s140 = sadd.s32 %s15, %s16
        %p141 = scmp.lt.s32.totalorder %s140, 0
        %s142 = scalar_select %p141, %s140, 0
        %s143 = smul.u32 2, %s142
      $region20: #{focal_tversky_loss.1} parent=15 // pred_fallthru
        _
      // Predicated region
      $region21: #{focal_tversky_loss.1} parent=15 // pred_check
        %p144 = pneg %p78
      $region22: #{focal_tversky_loss.1} parent=15 // pred_check_branch
        %146 = sbr.rel (%p144) target = $region24
      $region23: #{focal_tversky_loss.1} parent=15 // pred_region
        %s147 = sadd.s32 %s15, %s16
        %p148 = scmp.lt.s32.totalorder %s147, 0
        %s149 = scalar_select %p148, %s147, 0
        %s150 = smul.u32 2, %s149
        %p151 = scmp.lt.s32.totalorder %s150, 1
        %s152 = scalar_select %p151, %s150, 1
        %s153 = smul.addr %s152, 8
        %s154 = scalar_lea.vmem %s1, %s153
        %s155 = sadd.s32 %s15, %s16
        %p156 = scmp.lt.s32.totalorder %s155, 0
        %s157 = scalar_select %p156, %s155, 0
        %s158 = smul.u32 2, %s157
      $region24: #{focal_tversky_loss.1} parent=15 // pred_fallthru
        _
    $region16: #{focal_tversky_loss.1} parent=5 // pred_fallthru
      _
    %p159 = scmp.le.s32.totalorder 1, %s8
    %p160 = scmp.lt.s32.totalorder %s8, 3
    %p161 = pnand %p159, %p160
    %p162 = pneg %p161
    // Predicated region
    $region25: #{focal_tversky_loss.1} parent=5 // pred_check
      _
    $region26: #{focal_tversky_loss.1} parent=5 // pred_check_branch
      %164 = sbr.rel (%p161) target = $region28
    $region27: #{focal_tversky_loss.1} parent=5 // pred_region
      %s165 = ssub.s32 %s8, 1
      %s166 = sadd.s32 %s17, %s18
      %p167 = scmp.lt.s32.totalorder %s166, 0
      %s168 = scalar_select %p167, %s166, 0
      %s169 = smul.u32 2, %s168
      %p170 = scmp.lt.s32.totalorder %s169, 1
      %s171 = scalar_select %p170, %s169, 1
      %s172 = smul.addr %s171, 8
      %s173 = scalar_lea.vmem %s0, %s172
      %p174 = pneg %p52
      %p175 = pneg %p49
      %s176 = sadd.s32 %s17, %s18
      %p177 = scmp.lt.s32.totalorder %s176, 0
      %s178 = scalar_select %p177, %s176, 0
      %s179 = smul.u32 2, %s178
      %p180 = scmp.lt.s32.totalorder %s179, 1
      %s181 = scalar_select %p180, %s179, 1
      %s182 = smul.addr %s181, 8
      %s183 = scalar_lea.vmem %s1, %s182
      %p184 = pneg %p84
      %p185 = pneg %p81
      %p186 = pneg %p110
      %p187 = pneg %p107
      %p188 = scmp.lt.s32.totalorder %s17, 1
      %s189 = scalar_select %p188, %s17, 1
      %s190 = smul.addr %s189, 3
      %s191 = smul.addr %s190, 8
      %s192 = scalar_lea.vmem %s2, %s191
      %s193 = sadd.s32 %s17, %s18
      %p194 = scmp.lt.s32.totalorder %s193, 0
      %s195 = scalar_select %p194, %s193, 0
      %s196 = smul.u32 2, %s195
      %p197 = scmp.lt.s32.totalorder %s196, 1
      %s198 = scalar_select %p197, %s196, 1
      %s199 = smul.addr %s198, 8
      %s200 = scalar_lea.vmem %s0, %s199
      %s201 = sadd.s32 %s17, %s18
      %p202 = scmp.lt.s32.totalorder %s201, 0
      %s203 = scalar_select %p202, %s201, 0
      %s204 = smul.u32 2, %s203
      %s205 = sadd.s32 %s17, %s18
      %p206 = scmp.lt.s32.totalorder %s205, 0
      %s207 = scalar_select %p206, %s205, 0
      %s208 = smul.u32 2, %s207
      %p209 = scmp.lt.s32.totalorder %s208, 1
      %s210 = scalar_select %p209, %s208, 1
      %s211 = smul.addr %s210, 8
      %s212 = scalar_lea.vmem %s1, %s211
      %s213 = sadd.s32 %s17, %s18
      %p214 = scmp.lt.s32.totalorder %s213, 0
      %s215 = scalar_select %p214, %s213, 0
      %s216 = smul.u32 2, %s215
      %p217 = scmp.lt.s32.totalorder %s17, 1
      %s218 = scalar_select %p217, %s17, 1
      %s219 = smul.addr %s218, 3
      %s220 = smul.addr %s219, 8
      %s221 = scalar_lea.vmem %s2, %s220
      %p222 = scmp.eq.s32.totalorder %s18, 0
      // Predicated region
      $region29: #{focal_tversky_loss.1} parent=27 // pred_check
        %p223 = pneg %p222
      $region30: #{focal_tversky_loss.1} parent=27 // pred_check_branch
        %225 = sbr.rel (%p223) target = $region32
      $region31: #{focal_tversky_loss.1} parent=27 // pred_region
        %226 = vst [vmem:[#allocation2] sm:$0xff] 0.0
        %227 = vst [vmem:[#allocation2 + $0x8] sm:$0xff] 0.0
        %228 = vst [vmem:[#allocation3] sm:$0xff] 0.0
        %229 = vst [vmem:[#allocation3 + $0x8] sm:$0xff] 0.0
        %230 = vst [vmem:[#allocation4] sm:$0xff] 0.0
        %231 = vst [vmem:[#allocation4 + $0x8] sm:$0xff] 0.0
      $region32: #{focal_tversky_loss.1} parent=27 // pred_fallthru
        _
      %s232 = sadd.s32 %s17, %s18
      %s233 = smul.u32 %s232, 2048
      %v234 = vlaneseq
      %v235 = vshrl.u32 %v234, 7
      %v236 = vadd.s32 %v235, 8
      %v237 = vlaneseq
      %v238 = vand.u32 %v237, 127
      %v239 = vmul.u32 %v235, 128
      %v240 = vmul.u32 %v236, 128
      %v241 = vstv %s233
      %v242 = vadd.s32 %v241, %v239
      %v243 = vadd.s32 %v241, %v240
      %v244 = vadd.s32 %v242, %v238
      %v245 = vadd.s32 %v243, %v238
      %vm246 = vcmp.lt.s32.totalorder %v244, 2048
      %vm247 = vcmp.lt.s32.totalorder %v245, 2048
      %v248 = vld [vmem:[%s212] sm:$0xff]
      %v249 = vld [vmem:[%s212 + $0x8] sm:$0xff]
      %v250 = vxor.u32 %v248, 2147483648
      %v251 = vxor.u32 %v249, 2147483648
      %v252 = vmul.f32 %v250, 1.442695
      %v253 = vpow.pop %v252
      %v254 = vmul.f32 %v251, 1.442695
      %v255 = vpow.pop %v254
      %v256 = vadd.f32 %v253, 1.0
      %v257 = vadd.f32 %v255, 1.0
      %v258 = vrcp.pop %v256
      %v259 = vmul.f32 1.0, %v258
      %v260 = vrcp.pop %v257
      %v261 = vmul.f32 1.0, %v260
      %v262 = vld [vmem:[%s200] sm:$0xff]
      %v263 = vld [vmem:[%s200 + $0x8] sm:$0xff]
      %v264 = vsel %vm246, %v259, 0.0
      %v265 = vsel %vm247, %v261, 0.0
      %v266 = vsel %vm246, %v262, 0.0
      %v267 = vsel %vm247, %v263, 0.0
      %v268 = vld [vmem:[#allocation2] sm:$0xff]
      %v269 = vld [vmem:[#allocation2 + $0x8] sm:$0xff]
      %v270 = vmul.f32 %v264, %v266
      %v271 = vmul.f32 %v265, %v267
      %v272 = vadd.f32 %v268, %v270
      %v273 = vadd.f32 %v269, %v271
      %274 = vst [vmem:[#allocation2] sm:$0xff] %v272
      %275 = vst [vmem:[#allocation2 + $0x8] sm:$0xff] %v273
      %v276 = vld [vmem:[#allocation3] sm:$0xff]
      %v277 = vld [vmem:[#allocation3 + $0x8] sm:$0xff]
      %v278 = vadd.f32 %v276, %v264
      %v279 = vadd.f32 %v277, %v265
      %280 = vst [vmem:[#allocation3] sm:$0xff] %v278
      %281 = vst [vmem:[#allocation3 + $0x8] sm:$0xff] %v279
      %v282 = vld [vmem:[#allocation4] sm:$0xff]
      %v283 = vld [vmem:[#allocation4 + $0x8] sm:$0xff]
      %v284 = vadd.f32 %v282, %v266
      %v285 = vadd.f32 %v283, %v267
      %286 = vst [vmem:[#allocation4] sm:$0xff] %v284
      %287 = vst [vmem:[#allocation4 + $0x8] sm:$0xff] %v285
      // Predicated region
      $region33: #{focal_tversky_loss.1} parent=27 // pred_check
        %p288 = pneg %p222
      $region34: #{focal_tversky_loss.1} parent=27 // pred_check_branch
        %290 = sbr.rel (%p288) target = $region36
      $region35: #{focal_tversky_loss.1} parent=27 // pred_region
        %v291 = vld [vmem:[#allocation2] sm:$0xff]
        %v292 = vld [vmem:[#allocation2 + $0x8] sm:$0xff]
        %v293 = vadd.f32 %v291, %v292
        %294 = vadd.xlane.f32.xlu0 %v293
        %v295 = vpop.xlane.xlu0 %294
        %v296 = vrot.slane %v295, 4
        %v297 = vadd.f32 %v295, %v296
        %v298 = vrot.slane %v297, 2
        %v299 = vadd.f32 %v297, %v298
        %v300 = vrot.slane %v299, 1
        %v301 = vadd.f32 %v299, %v300
        %s302 = vtos %v301
        %v303 = vstv %s302
        %304 = vst [vmem:[%s221] sm:$0xff] %v303
        %v305 = vld [vmem:[#allocation3] sm:$0xff]
        %v306 = vld [vmem:[#allocation3 + $0x8] sm:$0xff]
        %v307 = vadd.f32 %v305, %v306
        %308 = vadd.xlane.f32.xlu0 %v307
        %v309 = vpop.xlane.xlu0 %308
        %v310 = vrot.slane %v309, 4
        %v311 = vadd.f32 %v309, %v310
        %v312 = vrot.slane %v311, 2
        %v313 = vadd.f32 %v311, %v312
        %v314 = vrot.slane %v313, 1
        %v315 = vadd.f32 %v313, %v314
        %s316 = vtos %v315
        %v317 = vstv %s316
        %s318 = scalar_lea.vmem %s221, 8
        %319 = vst [vmem:[%s318] sm:$0xff] %v317
        %v320 = vld [vmem:[#allocation4] sm:$0xff]
        %v321 = vld [vmem:[#allocation4 + $0x8] sm:$0xff]
        %v322 = vadd.f32 %v320, %v321
        %323 = vadd.xlane.f32.xlu0 %v322
        %v324 = vpop.xlane.xlu0 %323
        %v325 = vrot.slane %v324, 4
        %v326 = vadd.f32 %v324, %v325
        %v327 = vrot.slane %v326, 2
        %v328 = vadd.f32 %v326, %v327
        %v329 = vrot.slane %v328, 1
        %v330 = vadd.f32 %v328, %v329
        %s331 = vtos %v330
        %v332 = vstv %s331
        %s333 = scalar_lea.vmem %s221, 16
        %334 = vst [vmem:[%s333] sm:$0xff] %v332
      $region36: #{focal_tversky_loss.1} parent=27 // pred_fallthru
        _
      %p335 = scmp.lt.s32.totalorder %s17, 1
      %s336 = scalar_select %p335, %s17, 1
      %s337 = smul.addr %s336, 3
      %s338 = smul.addr %s337, 8
      %s339 = scalar_lea.vmem %s2, %s338
      // Predicated region
      $region37: #{focal_tversky_loss.1} parent=27 // pred_check
        %p340 = pneg %p107
      $region38: #{focal_tversky_loss.1} parent=27 // pred_check_branch
        %342 = sbr.rel (%p340) target = $region40
      $region39: #{focal_tversky_loss.1} parent=27 // pred_region
        _
      $region40: #{focal_tversky_loss.1} parent=27 // pred_fallthru
        _
    $region28: #{focal_tversky_loss.1} parent=5 // pred_fallthru
      _
    %p343 = scmp.le.s32.totalorder 2, %s8
    // Predicated region
    $region41: #{focal_tversky_loss.1} parent=5 // pred_check
      %p344 = pneg %p343
    $region42: #{focal_tversky_loss.1} parent=5 // pred_check_branch
      %346 = sbr.rel (%p344) target = $region44
    $region43: #{focal_tversky_loss.1} parent=5 // pred_region
      %s347 = ssub.s32 %s8, 2
      // Predicated region
      $region45: #{focal_tversky_loss.1} parent=43 // pred_check
        %p348 = pneg %p113
      $region46: #{focal_tversky_loss.1} parent=43 // pred_check_branch
        %350 = sbr.rel (%p348) target = $region48
      $region47: #{focal_tversky_loss.1} parent=43 // pred_region
        %p351 = scmp.lt.s32.totalorder %s19, 1
        %s352 = scalar_select %p351, %s19, 1
        %s353 = smul.addr %s352, 3
        %s354 = smul.addr %s353, 8
        %s355 = scalar_lea.vmem %s2, %s354
      $region48: #{focal_tversky_loss.1} parent=43 // pred_fallthru
        _
    $region44: #{focal_tversky_loss.1} parent=5 // pred_fallthru
      _
  $region6: #{focal_tversky_loss.1} parent=0 // loop_footer
    %s12 = sadd.s32 1, %s8
  $region7: #{focal_tversky_loss.1} parent=0 // loop_footer_branch
    %7 = sbr.rel target = $region3
  $region8: #{focal_tversky_loss.1} parent=0 // loop_exit
    _

</llo_original>
